<compile_context>
chip_gen: v7x
topology: tpu7x:2x2x1
jax: 0.10.0
libtpu: 0.0.40
codegen_flags: <defaults>
</compile_context>

<pallas_src>
import jax
import jax.numpy as jnp
from jax.experimental import pallas as pl
from jax.experimental.pallas import tpu as pltpu

_SUBLANES = 8
_LANES = 128


def _round_up(x, m):
    return ((x + m - 1) // m) * m


def _rmse_kernel(xp_ref, xt_ref, out_ref, acc_ref):
    """Accumulates sum over (b, t) of ||xp - xt||_2 for this partition."""
    s = pl.program_id(1)

    @pl.when(s == 0)
    def _init():
        acc_ref[...] = jnp.zeros_like(acc_ref)

    # Upcast after the native-dtype DMA; accumulate in f32.
    xp = xp_ref[...].astype(jnp.float32)          # (D, block_r, C)
    xt = xt_ref[...].astype(jnp.float32)
    diff = xp - xt
    sq_sum = jnp.sum(diff * diff, axis=0)         # (block_r, C): adds over leading D
    acc_ref[...] += jnp.sqrt(sq_sum)              # lane-dense sqrt

    @pl.when(s == pl.num_programs(1) - 1)
    def _finalize():
        total = jnp.sum(acc_ref[...])             # one full reduce per partition
        out_ref[...] = jnp.broadcast_to(total, out_ref.shape)


def rmse_loss(x_pred, x_true, *, lane_width=512, max_block_rows=512,
              num_partitions=2):
    """Pallas TPU implementation of the PyTorch rmse_loss.forward."""
    assert x_pred.shape == x_true.shape
    B, T, D = x_pred.shape
    N = B * T
    itemsize = jnp.dtype(x_pred.dtype).itemsize

    # Lane-dense layout plumbing: (B, T, D) -> (D, B*T) -> (D, rows, lanes).
    xp = jnp.transpose(x_pred, (2, 0, 1)).reshape(D, N)
    xt = jnp.transpose(x_true, (2, 0, 1)).reshape(D, N)

    C = min(lane_width, _round_up(N, _LANES))            # lane width (mult of 128)
    R = pl.cdiv(N, C)                                    # rows of the folded (b,t) axis
    block_r = _round_up(min(R, max_block_rows), _SUBLANES)
    # Cap each input tile at ~4 MiB so 2 inputs x 2 pipeline buffers stay well
    # within v7x's scoped VMEM (also fine on v5e/v6e).
    max_tile_bytes = 4 * 2**20
    while block_r > _SUBLANES and D * block_r * C * itemsize > max_tile_bytes:
        block_r = _round_up(block_r // 2, _SUBLANES)

    P = num_partitions
    R_pad = _round_up(R, P * block_r)
    N_pad = R_pad * C
    if N_pad != N:
        pad = N_pad - N                                  # zero pad: contributes 0 exactly
        xp = jnp.pad(xp, ((0, 0), (0, pad)))
        xt = jnp.pad(xt, ((0, 0), (0, pad)))
    xp = xp.reshape(D, R_pad, C)
    xt = xt.reshape(D, R_pad, C)

    steps = R_pad // (P * block_r)

    def in_map(p, s):
        return (0, p * steps + s, 0)

    in_spec = pl.BlockSpec((D, block_r, C), in_map)
    out_spec = pl.BlockSpec((_SUBLANES, _LANES), lambda p, s: (p, 0))

    in_tile_bytes = D * block_r * C * itemsize
    acc_bytes = block_r * C * 4
    vmem_limit = int(min(48 * 2**20,
                         max(16 * 2**20,
                             2 * 2 * in_tile_bytes + acc_bytes + (4 << 20))))

    partials = pl.pallas_call(
        _rmse_kernel,
        out_shape=jax.ShapeDtypeStruct((P * _SUBLANES, _LANES), jnp.float32),
        grid_spec=pltpu.PrefetchScalarGridSpec(
            num_scalar_prefetch=0,
            grid=(P, steps),
            in_specs=[in_spec, in_spec],
            out_specs=out_spec,
            scratch_shapes=[pltpu.VMEM((block_r, C), jnp.float32)],
        ),
        compiler_params=pltpu.CompilerParams(
            dimension_semantics=("parallel", "arbitrary"),
            vmem_limit_bytes=vmem_limit,
        ),
    )(xp, xt)

    # Tiny XLA combine: one partial per partition/core, then mean over batch.
    return jnp.sum(partials[::_SUBLANES, 0]) * (1.0 / B)


def _reference(x_pred, x_true):
    xp = x_pred.astype(jnp.float32)
    xt = x_true.astype(jnp.float32)
    l2 = jnp.sqrt(jnp.sum((xp - xt) ** 2, axis=2))
    return jnp.mean(jnp.sum(l2, axis=1), axis=0)


if __name__ == "__main__":
    key = jax.random.PRNGKey(0)
    k1, k2, k3, k4 = jax.random.split(key, 4)

    # Shape implied by the PyTorch module: (batch_size, dec_steps, loc_dim).
    B, T, D = 2, 8, 2
    x_pred = jax.random.normal(k1, (B, T, D), dtype=jnp.float32)
    x_true = jax.random.normal(k2, (B, T, D), dtype=jnp.float32)
    out = jax.block_until_ready(rmse_loss(x_pred, x_true))
    ref = _reference(x_pred, x_true)
    assert jnp.allclose(out, ref, rtol=1e-5, atol=1e-5), (out, ref)

    # Second (still small) check: forces a multi-step grid so the
    # init / accumulate / finalize phases and padding are exercised.
    B2, T2, D2 = 4, 700, 3
    xp2 = jax.random.normal(k3, (B2, T2, D2), dtype=jnp.float32)
    xt2 = jax.random.normal(k4, (B2, T2, D2), dtype=jnp.float32)
    out2 = jax.block_until_ready(
        rmse_loss(xp2, xt2, lane_width=128, max_block_rows=8))
    ref2 = _reference(xp2, xt2)
    assert jnp.allclose(out2, ref2, rtol=1e-4, atol=1e-4), (out2, ref2)

    print("KERNEL_OK")
</pallas_src>

<mosaic_0001>
module attributes {stable_mosaic.version = 11 : i64} {
  func.func @_rmse_kernel(%arg0: i32, %arg1: i32, %arg2: memref<2x8x128xf32, #tpu.memory_space<vmem>>, %arg3: memref<2x8x128xf32, #tpu.memory_space<vmem>>, %arg4: memref<8x128xf32, #tpu.memory_space<vmem>>, %arg5: memref<8x128xf32, #tpu.memory_space<vmem>>) attributes {dimension_semantics = [#tpu.dimension_semantics<parallel>, #tpu.dimension_semantics<arbitrary>], iteration_bounds = array<i64: 2, 1>, scalar_prefetch = 0 : i64, scratch_operands = 1 : i64, tpu.core_type = #tpu.core_type<tc>, window_params = [{transform_indices = @transform_0, window_bounds = array<i64: 2, 8, 128>}, {transform_indices = @transform_1, window_bounds = array<i64: 2, 8, 128>}, {transform_indices = @transform_2, window_bounds = array<i64: 8, 128>}]} {
    %c0_i32 = arith.constant 0 : i32
    %0 = arith.cmpi eq, %arg1, %c0_i32 : i32
    %1 = arith.extui %0 : i1 to i32
    %c0_i32_0 = arith.constant 0 : i32
    %2 = arith.cmpi ne, %1, %c0_i32_0 : i32
    scf.if %2 {
      %cst_12 = arith.constant 0.000000e+00 : f32
      %15 = vector.broadcast %cst_12 : f32 to vector<8x128xf32>
      %c0_13 = arith.constant 0 : index
      %c0_14 = arith.constant 0 : index
      %16 = vector.load %arg5[%c0_13, %c0_14] : memref<8x128xf32, #tpu.memory_space<vmem>>, vector<8x128xf32>
      tpu.vector_store %arg5[%c0_13, %c0_14], %15 {strides = array<i32>} : memref<8x128xf32, #tpu.memory_space<vmem>>, vector<8x128xf32>,
    } else {
    }
    %c0 = arith.constant 0 : index
    %c0_1 = arith.constant 0 : index
    %c0_2 = arith.constant 0 : index
    %3 = vector.load %arg2[%c0, %c0_1, %c0_2] : memref<2x8x128xf32, #tpu.memory_space<vmem>>, vector<2x8x128xf32>
    %c0_3 = arith.constant 0 : index
    %c0_4 = arith.constant 0 : index
    %c0_5 = arith.constant 0 : index
    %4 = vector.load %arg3[%c0_3, %c0_4, %c0_5] : memref<2x8x128xf32, #tpu.memory_space<vmem>>, vector<2x8x128xf32>
    %5 = arith.subf %3, %4 : vector<2x8x128xf32>
    %6 = arith.mulf %5, %5 : vector<2x8x128xf32>
    %cst = arith.constant dense<0.000000e+00> : vector<8x128xf32>
    %7 = vector.multi_reduction <add>, %6, %cst [0] : vector<2x8x128xf32> to vector<8x128xf32>
    %c0_6 = arith.constant 0 : index
    %c0_7 = arith.constant 0 : index
    %8 = vector.load %arg5[%c0_6, %c0_7] : memref<8x128xf32, #tpu.memory_space<vmem>>, vector<8x128xf32>
    %9 = math.sqrt %7 : vector<8x128xf32>
    %10 = arith.addf %8, %9 : vector<8x128xf32>
    %c0_8 = arith.constant 0 : index
    %c0_9 = arith.constant 0 : index
    %11 = vector.load %arg5[%c0_8, %c0_9] : memref<8x128xf32, #tpu.memory_space<vmem>>, vector<8x128xf32>
    tpu.vector_store %arg5[%c0_8, %c0_9], %10 {strides = array<i32>} : memref<8x128xf32, #tpu.memory_space<vmem>>, vector<8x128xf32>,
    %c0_i32_10 = arith.constant 0 : i32
    %12 = arith.cmpi eq, %arg1, %c0_i32_10 : i32
    %13 = arith.extui %12 : i1 to i32
    %c0_i32_11 = arith.constant 0 : i32
    %14 = arith.cmpi ne, %13, %c0_i32_11 : i32
    scf.if %14 {
      %c0_12 = arith.constant 0 : index
      %c0_13 = arith.constant 0 : index
      %15 = vector.load %arg5[%c0_12, %c0_13] : memref<8x128xf32, #tpu.memory_space<vmem>>, vector<8x128xf32>
      %16 = vector.shape_cast %15 : vector<8x128xf32> to vector<1x8x128xf32>
      %cst_14 = arith.constant dense<0.000000e+00> : vector<1xf32>
      %17 = vector.multi_reduction <add>, %16, %cst_14 [1, 2] : vector<1x8x128xf32> to vector<1xf32>
      %18 = vector.shape_cast %17 : vector<1xf32> to vector<1x1x1xf32>
      %19 = vector.extract %18[0, 0, 0] : f32 from vector<1x1x1xf32>
      %20 = vector.broadcast %19 : f32 to vector<8x128xf32>
      %c0_15 = arith.constant 0 : index
      %c0_16 = arith.constant 0 : index
      %21 = vector.load %arg4[%c0_15, %c0_16] : memref<8x128xf32, #tpu.memory_space<vmem>>, vector<8x128xf32>
      tpu.vector_store %arg4[%c0_15, %c0_16], %20 {strides = array<i32>} : memref<8x128xf32, #tpu.memory_space<vmem>>, vector<8x128xf32>,
    } else {
    }
    return
  }
  func.func @transform_0(%arg0: i32, %arg1: i32) -> (i32, i32, i32) {
    %c1_i32 = arith.constant 1 : i32
    %0 = arith.muli %arg0, %c1_i32 : i32
    %1 = arith.addi %0, %arg1 : i32
    %c0_i32 = arith.constant 0 : i32
    %c0_i32_0 = arith.constant 0 : i32
    %c0_i32_1 = arith.constant 0 : i32
    return %c0_i32, %1, %c0_i32_0 : i32, i32, i32
  }
  func.func @transform_1(%arg0: i32, %arg1: i32) -> (i32, i32, i32) {
    %c1_i32 = arith.constant 1 : i32
    %0 = arith.muli %arg0, %c1_i32 : i32
    %1 = arith.addi %0, %arg1 : i32
    %c0_i32 = arith.constant 0 : i32
    %c0_i32_0 = arith.constant 0 : i32
    %c0_i32_1 = arith.constant 0 : i32
    return %c0_i32, %1, %c0_i32_0 : i32, i32, i32
  }
  func.func @transform_2(%arg0: i32, %arg1: i32) -> (i32, i32) {
    %c0_i32 = arith.constant 0 : i32
    %c0_i32_0 = arith.constant 0 : i32
    return %arg0, %c0_i32 : i32, i32
  }
}

</mosaic_0001>

<llo_original>
// kernel: tpu_custom_call.1
$region0: #{tpu_custom_call.1}
  #allocation0 [shape = 'u32[]', space=smem, size = 0x4, offset = 0x4, fixed_abs, tag = 'smem constant byte address 0x4 - core index']
  #allocation1 [shape = 'u32[144,128]{1,0:T(1,128)}', space=vmem, size = 0x12000, scoped, tag = 'internal scratch']
  #allocation2 [shape = 'f32[8,128]{1,0:T(8,128)}', space=vmem, size = 0x1000, scoped, tag = 'scratch operand']
  %s0 = inlined_call_operand.hbm [shape: f32[2,16,128], index: 0, kind: input, shape index: {}]
  %s1 = inlined_call_operand.hbm [shape: f32[2,16,128], index: 1, kind: input, shape index: {}]
  %s2 = inlined_call_operand.hbm [shape: f32[16,128], index: 2, kind: output, shape index: {}]
  %s3 = sld [smem:[#allocation0]]
  $region57: #{tpu_custom_call.1} parent=0
    _
  %s5 = ssub.s32 1, %s3
  %s6 = scalar_select 0, %s5, %s3
  $region1: #{tpu_custom_call.1} parent=0
    #allocation3 [shape = 'u8[16384]{0}', space=vmem, size = 0x4000, scoped, tag = 'input window, operand 0']
    #allocation4 [shape = 's32[2]{0}', space=sflag, size = 0x8, scoped, tag = 'scoped memory for tpu_custom_call.1']
    #allocation5 [shape = 's32[2]{0}', space=sflag, size = 0x8, scoped, tag = 'scoped memory for tpu_custom_call.1']
    #allocation6 [shape = 'u8[16384]{0}', space=vmem, size = 0x4000, scoped, tag = 'input window, operand 1']
    #allocation7 [shape = 's32[2]{0}', space=sflag, size = 0x8, scoped, tag = 'scoped memory for tpu_custom_call.1']
    #allocation8 [shape = 'u8[8192]{0}', space=vmem, size = 0x2000, scoped, tag = 'output window, operand 0']
    %7 = vsyncpa [#allocation4], 0
    %s8 = scalar_lea.sflag [#allocation4], 1
    %9 = vsyncpa %s8, 0
    %10 = vsyncpa [#allocation7], 0
    %s11 = scalar_lea.sflag [#allocation7], 1
    %12 = vsyncpa %s11, 0
    %13 = vsyncpa [#allocation5], 0
    %s14 = scalar_lea.sflag [#allocation5], 1
    %15 = vsyncpa %s14, 0
    loop: start=0, step=1, limit=4
    $region2: #{tpu_custom_call.1} parent=1 // loop_pre_header
      _
    $region3: #{tpu_custom_call.1} parent=1 // loop_header
      %s17 = sphi 0, %s21
      %p18 = scmp.ge.s32.totalorder %s17, 4
      %s24 = sphi 0, %s36
      %s25 = sphi 0, %s32
      %s26 = sphi 0, %s24
      %s27 = sphi 0, %s25
      %s28 = sphi 0, %s26
      %s29 = sphi 0, %s27
      %s41 = sphi 0, %s43
      %s44 = sphi 0, %s41
      %s45 = sphi 0, %s44
      %s61 = sphi 0, %s45
      %s69 = sphi 0, %s71
      %s72 = sphi 0, %s69
      %s73 = sphi 0, %s72
      %s89 = sphi 0, %s73
      %s95 = sphi 0, %s97
      %s98 = sphi 0, %s95
      %s99 = sphi 0, %s98
      %s115 = sphi 0, %s99
    $region4: #{tpu_custom_call.1} parent=1 // loop_header_branch
      %20 = sbr.rel (%p18) target = $region8
    $region5: #{tpu_custom_call.1} parent=1 // loop_body
      %s22 = ssub.s32 %s17, 1
      %s23 = ssub.s32 %s17, 2
      %s30 = sadd.s32 1, %s25
      %p31 = scmp.ge.s32.totalorder %s30, 1
      %s32 = scalar_select %p31, 0, %s30
      %s33 = sadd.s32 1, %s24
      %s34 = scalar_select %p31, %s33, %s24
      %p35 = scmp.ge.s32.totalorder %s34, 2
      %s36 = scalar_select %p35, 0, %s34
      %s37 = sadd.s32 %s24, %s25
      %s38 = sadd.s32 %s36, %s32
      %s39 = ssub.s32 %s37, %s38
      %p40 = scmp.eq.s32.totalorder %s39, 0
      %s42 = sadd.s32 %s41, 1
      %s43 = scalar_select %p40, %s41, %s42
      %p46 = pneg %p40
      %p47 = scmp.eq.s32.totalorder %s17, 1
      %p48 = por %p46, %p47
      %p49 = scmp.ne.s32.totalorder %s41, %s44
      %p50 = scmp.eq.s32.totalorder %s17, 0
      %p51 = por %p49, %p50
      %p52 = scmp.ne.s32.totalorder %s41, %s44
      %p53 = scmp.eq.s32.totalorder %s22, 1
      %p54 = por %p52, %p53
      %p55 = scmp.ne.s32.totalorder %s44, %s45
      %p56 = scmp.eq.s32.totalorder %s22, 0
      %p57 = por %p55, %p56
      %p58 = scmp.ne.s32.totalorder %s44, %s45
      %p59 = scmp.eq.s32.totalorder %s23, 1
      %p60 = por %p58, %p59
      %p62 = scmp.ne.s32.totalorder %s45, %s61
      %p63 = scmp.eq.s32.totalorder %s23, 0
      %p64 = por %p62, %p63
      %s65 = sadd.s32 %s24, %s25
      %s66 = sadd.s32 %s36, %s32
      %s67 = ssub.s32 %s65, %s66
      %p68 = scmp.eq.s32.totalorder %s67, 0
      %s70 = sadd.s32 %s69, 1
      %s71 = scalar_select %p68, %s69, %s70
      %p74 = pneg %p68
      %p75 = scmp.eq.s32.totalorder %s17, 1
      %p76 = por %p74, %p75
      %p77 = scmp.ne.s32.totalorder %s69, %s72
      %p78 = scmp.eq.s32.totalorder %s17, 0
      %p79 = por %p77, %p78
      %p80 = scmp.ne.s32.totalorder %s69, %s72
      %p81 = scmp.eq.s32.totalorder %s22, 1
      %p82 = por %p80, %p81
      %p83 = scmp.ne.s32.totalorder %s72, %s73
      %p84 = scmp.eq.s32.totalorder %s22, 0
      %p85 = por %p83, %p84
      %p86 = scmp.ne.s32.totalorder %s72, %s73
      %p87 = scmp.eq.s32.totalorder %s23, 1
      %p88 = por %p86, %p87
      %p90 = scmp.ne.s32.totalorder %s73, %s89
      %p91 = scmp.eq.s32.totalorder %s23, 0
      %p92 = por %p90, %p91
      %s93 = ssub.s32 %s24, %s36
      %p94 = scmp.eq.s32.totalorder %s93, 0
      %s96 = sadd.s32 %s95, 1
      %s97 = scalar_select %p94, %s95, %s96
      %p100 = pneg %p94
      %p101 = scmp.eq.s32.totalorder %s17, 1
      %p102 = por %p100, %p101
      %p103 = scmp.ne.s32.totalorder %s95, %s98
      %p104 = scmp.eq.s32.totalorder %s17, 0
      %p105 = por %p103, %p104
      %p106 = scmp.ne.s32.totalorder %s95, %s98
      %p107 = scmp.eq.s32.totalorder %s22, 1
      %p108 = por %p106, %p107
      %p109 = scmp.ne.s32.totalorder %s98, %s99
      %p110 = scmp.eq.s32.totalorder %s22, 0
      %p111 = por %p109, %p110
      %p112 = scmp.ne.s32.totalorder %s98, %s99
      %p113 = scmp.eq.s32.totalorder %s23, 1
      %p114 = por %p112, %p113
      %p116 = scmp.ne.s32.totalorder %s99, %s115
      %p117 = scmp.eq.s32.totalorder %s23, 0
      %p118 = por %p116, %p117
      %p119 = scmp.le.s32.totalorder 1, %s17
      %p120 = scmp.lt.s32.totalorder %s17, 3
      %p121 = pnand %p119, %p120
      %p122 = pneg %p121
      // Predicated region
      $region9: #{tpu_custom_call.1} parent=5 // pred_check
        _
      $region10: #{tpu_custom_call.1} parent=5 // pred_check_branch
        %124 = sbr.rel (%p121) target = $region12
      $region11: #{tpu_custom_call.1} parent=5 // pred_region
        %s125 = ssub.s32 %s17, 1
      $region12: #{tpu_custom_call.1} parent=5 // pred_fallthru
        _
      %p126 = scmp.lt.s32.totalorder %s17, 2
      // Predicated region
      $region13: #{tpu_custom_call.1} parent=5 // pred_check
        %p127 = pneg %p126
      $region14: #{tpu_custom_call.1} parent=5 // pred_check_branch
        %129 = sbr.rel (%p127) target = $region16
      $region15: #{tpu_custom_call.1} parent=5 // pred_region
        // Predicated region
        $region17: #{tpu_custom_call.1} parent=15 // pred_check
          %p130 = pneg %p51
        $region18: #{tpu_custom_call.1} parent=15 // pred_check_branch
          %132 = sbr.rel (%p130) target = $region20
        $region19: #{tpu_custom_call.1} parent=15 // pred_region
          %s133 = sand.u32 %s41, 1
          %s134 = scalar_lea.sflag [#allocation4], %s133
          %s135 = sand.u32 %s41, 1
          %s136 = smul.addr %s135, 16
          %s137 = scalar_lea.vmem [#allocation3], %s136
          %s138 = sadd.s32 %s24, %s25
          %s140 = ssub.s32 256, 256
          %141 = vsyncadd %s134, %s140
          %s142 = smul.addr %s138, 128
          %s143 = scalar_lea.hbm %s0, %s142
          %s144 = sshll.u32 %s137, 4
          %s145 = int_to_ptr.vmem [resolvable:$true] %s144
          %150 = dma.hbm_to_vmem [thread:$0]  %s143, 256, %s145, %s134, 256, 128, 8
        $region20: #{tpu_custom_call.1} parent=15 // pred_fallthru
          _
        // Predicated region
        $region21: #{tpu_custom_call.1} parent=15 // pred_check
          %p151 = pneg %p79
        $region22: #{tpu_custom_call.1} parent=15 // pred_check_branch
          %153 = sbr.rel (%p151) target = $region24
        $region23: #{tpu_custom_call.1} parent=15 // pred_region
          %s154 = sand.u32 %s69, 1
          %s155 = scalar_lea.sflag [#allocation7], %s154
          %s156 = sand.u32 %s69, 1
          %s157 = smul.addr %s156, 16
          %s158 = scalar_lea.vmem [#allocation6], %s157
          %s159 = sadd.s32 %s24, %s25
          %s161 = ssub.s32 256, 256
          %162 = vsyncadd %s155, %s161
          %s163 = smul.addr %s159, 128
          %s164 = scalar_lea.hbm %s1, %s163
          %s165 = sshll.u32 %s158, 4
          %s166 = int_to_ptr.vmem [resolvable:$true] %s165
          %171 = dma.hbm_to_vmem [thread:$0]  %s164, 256, %s166, %s155, 256, 128, 8
        $region24: #{tpu_custom_call.1} parent=15 // pred_fallthru
          _
      $region16: #{tpu_custom_call.1} parent=5 // pred_fallthru
        _
      %p172 = scmp.le.s32.totalorder 1, %s17
      %p173 = scmp.lt.s32.totalorder %s17, 3
      %p174 = pnand %p172, %p173
      %p175 = pneg %p174
      // Predicated region
      $region25: #{tpu_custom_call.1} parent=5 // pred_check
        _
      $region26: #{tpu_custom_call.1} parent=5 // pred_check_branch
        %177 = sbr.rel (%p174) target = $region28
      $region27: #{tpu_custom_call.1} parent=5 // pred_region
        %s178 = ssub.s32 %s17, 1
        %s179 = sand.u32 %s44, 1
        %s180 = scalar_lea.sflag [#allocation4], %s179
        %s181 = sand.u32 %s44, 1
        %s182 = smul.addr %s181, 16
        %s183 = scalar_lea.vmem [#allocation3], %s182
        // Predicated region
        $region29: #{tpu_custom_call.1} parent=27 // pred_check
          %p184 = pneg %p57
        $region30: #{tpu_custom_call.1} parent=27 // pred_check_branch
          %186 = sbr.rel (%p184) target = $region32
        $region31: #{tpu_custom_call.1} parent=27 // pred_region
          %187 = dma.done %s180, 256
        $region32: #{tpu_custom_call.1} parent=27 // pred_fallthru
          _
        %s188 = sand.u32 %s72, 1
        %s189 = scalar_lea.sflag [#allocation7], %s188
        %s190 = sand.u32 %s72, 1
        %s191 = smul.addr %s190, 16
        %s192 = scalar_lea.vmem [#allocation6], %s191
        // Predicated region
        $region33: #{tpu_custom_call.1} parent=27 // pred_check
          %p193 = pneg %p85
        $region34: #{tpu_custom_call.1} parent=27 // pred_check_branch
          %195 = sbr.rel (%p193) target = $region36
        $region35: #{tpu_custom_call.1} parent=27 // pred_region
          %196 = dma.done %s189, 256
        $region36: #{tpu_custom_call.1} parent=27 // pred_fallthru
          _
        %s197 = sand.u32 %s44, 1
        %s198 = scalar_lea.sflag [#allocation4], %s197
        %s199 = sand.u32 %s44, 1
        %s200 = smul.addr %s199, 16
        %s201 = scalar_lea.vmem [#allocation3], %s200
        %p202 = pneg %p57
        %p203 = pneg %p54
        %s204 = sand.u32 %s72, 1
        %s205 = scalar_lea.sflag [#allocation7], %s204
        %s206 = sand.u32 %s72, 1
        %s207 = smul.addr %s206, 16
        %s208 = scalar_lea.vmem [#allocation6], %s207
        %p209 = pneg %p85
        %p210 = pneg %p82
        %p211 = pneg %p111
        %p212 = pneg %p108
        %s213 = sand.u32 %s98, 1
        %s214 = scalar_lea.sflag [#allocation5], %s213
        %s215 = sand.u32 %s98, 1
        %s216 = smul.addr %s215, 8
        %s217 = scalar_lea.vmem [#allocation8], %s216
        %s218 = sadd.s32 %s26, %s27
        %s219 = sadd.s32 %s26, %s27
        %p220 = scmp.eq.s32.totalorder %s27, 0
        // Predicated region
        $region37: #{tpu_custom_call.1} parent=27 // pred_check
          %p221 = pneg %p220
        $region38: #{tpu_custom_call.1} parent=27 // pred_check_branch
          %223 = sbr.rel (%p221) target = $region40
        $region39: #{tpu_custom_call.1} parent=27 // pred_region
          %224 = vst [vmem:[#allocation2] sm:$0xff] 0.0
        $region40: #{tpu_custom_call.1} parent=27 // pred_fallthru
          _
        %v225 = vld [vmem:[%s183] sm:$0xff]
        %v226 = vld [vmem:[%s183 + $0x8] sm:$0xff]
        %v227 = vld [vmem:[%s192] sm:$0xff]
        %v228 = vld [vmem:[%s192 + $0x8] sm:$0xff]
        %v229 = vsub.f32 %v225, %v227
        %v230 = vsub.f32 %v226, %v228
        %v231 = vmul.f32 %v229, %v229
        %v232 = vmul.f32 %v230, %v230
        %v233 = vadd.f32 %v231, %v232
        %v234 = vld [vmem:[#allocation2] sm:$0xff]
        %v235 = vrsqrt.pop %v233
        %v236 = vmul.f32 %v233, %v235
        %vm237 = vcmp.eq.f32.partialorder %v233, inf
        %v238 = vsel %vm237, %v233, %v236
        %vm239 = vcmp.eq.f32.partialorder %v233, 0.0
        %v240 = vand.u32 %v233, 2147483648
        %v241 = vsel %vm239, %v240, %v238
        %v242 = vadd.f32 %v234, %v241
        %243 = vst [vmem:[#allocation2] sm:$0xff] %v242
        // Predicated region
        $region41: #{tpu_custom_call.1} parent=27 // pred_check
          %p244 = pneg %p220
        $region42: #{tpu_custom_call.1} parent=27 // pred_check_branch
          %246 = sbr.rel (%p244) target = $region44
        $region43: #{tpu_custom_call.1} parent=27 // pred_region
          %v247 = vld [vmem:[#allocation2] sm:$0xff]
          %248 = vadd.xlane.f32.xlu0 %v247
          %v249 = vpop.xlane.xlu0 %248
          %v250 = vrot.slane %v249, 4
          %v251 = vadd.f32 %v249, %v250
          %v252 = vrot.slane %v251, 2
          %v253 = vadd.f32 %v251, %v252
          %v254 = vrot.slane %v253, 1
          %v255 = vadd.f32 %v253, %v254
          %s256 = vtos %v255
          %v257 = vstv %s256
          %258 = vst [vmem:[%s217] sm:$0xff] %v257
        $region44: #{tpu_custom_call.1} parent=27 // pred_fallthru
          _
        %s259 = sand.u32 %s98, 1
        %s260 = scalar_lea.sflag [#allocation5], %s259
        %s261 = sand.u32 %s98, 1
        %s262 = smul.addr %s261, 8
        %s263 = scalar_lea.vmem [#allocation8], %s262
        // Predicated region
        $region45: #{tpu_custom_call.1} parent=27 // pred_check
          %p264 = pneg %p108
        $region46: #{tpu_custom_call.1} parent=27 // pred_check_branch
          %266 = sbr.rel (%p264) target = $region48
        $region47: #{tpu_custom_call.1} parent=27 // pred_region
          %s268 = ssub.s32 128, 128
          %269 = vsyncadd %s260, %s268
          %s270 = smul.addr %s26, 128
          %s271 = scalar_lea.hbm %s2, %s270
          %s273 = sshll.u32 %s263, 4
          %s274 = int_to_ptr.vmem [resolvable:$true] %s273
          %276 = dma.vmem_to_hbm [thread:$0]  %s274, 128, %s271, %s260
        $region48: #{tpu_custom_call.1} parent=27 // pred_fallthru
          _
      $region28: #{tpu_custom_call.1} parent=5 // pred_fallthru
        _
      %p277 = scmp.le.s32.totalorder 2, %s17
      // Predicated region
      $region49: #{tpu_custom_call.1} parent=5 // pred_check
        %p278 = pneg %p277
      $region50: #{tpu_custom_call.1} parent=5 // pred_check_branch
        %280 = sbr.rel (%p278) target = $region52
      $region51: #{tpu_custom_call.1} parent=5 // pred_region
        %s281 = ssub.s32 %s17, 2
        // Predicated region
        $region53: #{tpu_custom_call.1} parent=51 // pred_check
          %p282 = pneg %p114
        $region54: #{tpu_custom_call.1} parent=51 // pred_check_branch
          %284 = sbr.rel (%p282) target = $region56
        $region55: #{tpu_custom_call.1} parent=51 // pred_region
          %s285 = sand.u32 %s99, 1
          %s286 = scalar_lea.sflag [#allocation5], %s285
          %s287 = sand.u32 %s99, 1
          %s288 = smul.addr %s287, 8
          %s289 = scalar_lea.vmem [#allocation8], %s288
          %290 = dma.done %s286, 128
        $region56: #{tpu_custom_call.1} parent=51 // pred_fallthru
          _
      $region52: #{tpu_custom_call.1} parent=5 // pred_fallthru
        _
    $region6: #{tpu_custom_call.1} parent=1 // loop_footer
      %s21 = sadd.s32 1, %s17
    $region7: #{tpu_custom_call.1} parent=1 // loop_footer_branch
      %16 = sbr.rel target = $region3
    $region8: #{tpu_custom_call.1} parent=1 // loop_exit
      _
    %291 = vsyncpa [#allocation4], 1
    %s292 = scalar_lea.sflag [#allocation4], 1
    %293 = vsyncpa %s292, 1
    %294 = vsyncpa [#allocation7], 1
    %s295 = scalar_lea.sflag [#allocation7], 1
    %296 = vsyncpa %s295, 1
    %297 = vsyncpa [#allocation5], 1
    %s298 = scalar_lea.sflag [#allocation5], 1
    %299 = vsyncpa %s298, 1

</llo_original>
